<compile_context>
chip_gen: v7x
topology: tpu7x:2x2x1
jax: 0.10.0
libtpu: 0.0.40
codegen_flags: <defaults>
</compile_context>

<pallas_src>
import functools

import jax
import jax.numpy as jnp
from jax import lax
from jax.experimental import pallas as pl
from jax.experimental.pallas import tpu as pltpu


def attn_general_kernel(hidden_ref, w_ref, enc_ref, out_ref, v_ref, *, seq_len, tile_l):
    """Grid axis 0 streams tiles of encoder_outputs (often a single step).

    hidden_ref: (1, H)        resident (constant block index)
    w_ref:      (H, H)        resident, DMA'd once
    enc_ref:    (tile_l, H)   streamed / double-buffered
    out_ref:    (L_out, 1)    resident score column -> final probabilities
    v_ref:      (1, H)        scratch: hidden @ W, cached at the streaming dtype
    """
    l = pl.program_id(0)
    n_tiles = pl.num_programs(0)

    # Project the hidden state through W once (bias omitted: constant under softmax).
    #   v_k = sum_j hidden_j * W[j, k]
    @pl.when(l == 0)
    def _():
        v = lax.dot_general(
            hidden_ref[...], w_ref[...],
            (((1,), (0,)), ((), ())),
            preferred_element_type=jnp.float32)
        v_ref[...] = v.astype(v_ref.dtype)          # cast once, not per step

    # Scores for this encoder tile as a (tile_l, 1) column: enc is the natural
    # (un-transposed) MXU operand, so no per-step transpose of the big tile.
    scores = lax.dot_general(
        enc_ref[...], v_ref[...],
        (((1,), (1,)), ((), ())),
        preferred_element_type=jnp.float32)          # (tile_l, 1) f32

    off = l * tile_l
    if tile_l % 128 == 0:
        off = pl.multiple_of(off, 128)
    out_ref[pl.ds(off, tile_l), :] = scores

    # Finalize: mask padded / ragged rows, softmax over the resident score column.
    @pl.when(l == n_tiles - 1)
    def _():
        s = out_ref[...]                                             # (L_out, 1)
        row = lax.broadcasted_iota(jnp.int32, s.shape, 0)
        s = jnp.where(row < seq_len, s, -jnp.inf)                    # mask BEFORE max
        m = jnp.max(s, axis=0, keepdims=True)
        e = jnp.exp(s - m)
        denom = jnp.sum(e, axis=0, keepdims=True)
        out_ref[...] = (e / denom).astype(out_ref.dtype)


def attn_forward(hidden, encoder_outputs, w):
    """hidden: (H,), encoder_outputs: (L, H), w: (H, H) [PyTorch Linear (out,in)] -> (1, L).

    The Linear bias is intentionally not an input: it only shifts every score by
    the same constant hidden.b, which cancels under softmax.
    """
    L, H = encoder_outputs.shape
    hidden2d = hidden.reshape(1, H)

    # Tile selection: one grid step when the whole encoder block fits the budget
    # (the common case); otherwise large L tiles, grid = cdiv(L, tile_l).
    row_bytes = H * encoder_outputs.dtype.itemsize
    ENC_BLOCK_BUDGET = 8 * 1024 * 1024                 # per-buffer; x2 for double-buffering
    if L * row_bytes <= ENC_BLOCK_BUDGET:
        tile_l, n_tiles = L, 1
    else:
        rows = max(128, (ENC_BLOCK_BUDGET // row_bytes) // 128 * 128)
        tile_l = min(rows, 4096)
        n_tiles = -(-L // tile_l)                      # cdiv; ragged tail masked in-kernel
    L_out = tile_l * n_tiles                           # tiny (L_out floats); padding is free

    kernel = functools.partial(attn_general_kernel, seq_len=L, tile_l=tile_l)

    out_col = pl.pallas_call(
        kernel,
        out_shape=jax.ShapeDtypeStruct((L_out, 1), jnp.float32),
        grid=(n_tiles,),
        in_specs=[
            pl.BlockSpec((1, H), lambda l: (0, 0)),        # hidden: VMEM-resident
            pl.BlockSpec((H, H), lambda l: (0, 0)),        # W: resident, DMA'd once
            pl.BlockSpec((tile_l, H), lambda l: (l, 0)),   # enc: streamed tiles (no wrapper pad)
        ],
        out_specs=pl.BlockSpec((L_out, 1), lambda l: (0, 0)),  # score column: resident
        scratch_shapes=[pltpu.VMEM((1, H), encoder_outputs.dtype)],
        compiler_params=pltpu.CompilerParams(
            dimension_semantics=("arbitrary",),            # output revisited across L
            vmem_limit_bytes=48 * 1024 * 1024),            # safe on v5e/v6e (128 MiB) and v7x (64 MiB)
    )(hidden2d, w, encoder_outputs)

    # Tiny reshape of the (L,)-float result back to the module's (1, L) layout.
    return out_col[:L, 0][None, :]


def attn_reference(hidden, encoder_outputs, w, b):
    # Pure-JAX reference, *including* the Linear bias (to demonstrate the kernel's
    # bias-drop is exact under softmax up to fp rounding).
    energy = encoder_outputs @ w.T + b          # (L, H)
    scores = energy @ hidden                    # (L,)
    return jax.nn.softmax(scores)[None, :]      # (1, L)


if __name__ == "__main__":
    hidden_size = 32   # small stand-in for the module's hidden_size=512
    max_len = 8        # sequence length L

    key = jax.random.PRNGKey(0)
    k_h, k_e, k_w, k_b = jax.random.split(key, 4)

    # nn.Linear(hidden_size, hidden_size) parameter shapes
    w = jax.random.normal(k_w, (hidden_size, hidden_size), jnp.float32) * 0.1
    b = jax.random.normal(k_b, (hidden_size,), jnp.float32) * 0.1

    # inputs implied by forward(): hidden (H,), encoder_outputs (L, H)
    hidden = jax.random.normal(k_h, (hidden_size,), jnp.float32)
    encoder_outputs = jax.random.normal(k_e, (max_len, hidden_size), jnp.float32)

    out = attn_forward(hidden, encoder_outputs, w)
    out = jax.block_until_ready(out)

    ref = attn_reference(hidden, encoder_outputs, w, b)
    assert out.shape == (1, max_len)
    assert jnp.allclose(out, ref, atol=1e-5, rtol=1e-5), "mismatch vs reference"

    print("KERNEL_OK")
</pallas_src>

<mosaic_0001>
module attributes {stable_mosaic.version = 11 : i64} {
  func.func @attn_general_kernel(%arg0: i32, %arg1: memref<1x32xf32, #tpu.memory_space<vmem>>, %arg2: memref<32x32xf32, #tpu.memory_space<vmem>>, %arg3: memref<8x32xf32, #tpu.memory_space<vmem>>, %arg4: memref<8x1xf32, #tpu.memory_space<vmem>>, %arg5: memref<1x32xf32, #tpu.memory_space<vmem>>) attributes {dimension_semantics = [#tpu.dimension_semantics<arbitrary>], iteration_bounds = array<i64: 1>, scalar_prefetch = 0 : i64, scratch_operands = 1 : i64, tpu.core_type = #tpu.core_type<tc>, window_params = [{pipeline_mode = #tpu.pipeline_mode<synchronous>, transform_indices = @transform_0, window_bounds = array<i64: 1, 32>}, {pipeline_mode = #tpu.pipeline_mode<synchronous>, transform_indices = @transform_1, window_bounds = array<i64: 32, 32>}, {transform_indices = @transform_2, window_bounds = array<i64: 8, 32>}, {pipeline_mode = #tpu.pipeline_mode<synchronous>, transform_indices = @transform_3, window_bounds = array<i64: 8, 1>}]} {
    %c0_i32 = arith.constant 0 : i32
    %0 = arith.cmpi eq, %arg0, %c0_i32 : i32
    %1 = arith.extui %0 : i1 to i32
    %c0_i32_0 = arith.constant 0 : i32
    %2 = arith.cmpi ne, %1, %c0_i32_0 : i32
    scf.if %2 {
      %c0_7 = arith.constant 0 : index
      %c0_8 = arith.constant 0 : index
      %12 = vector.load %arg1[%c0_7, %c0_8] : memref<1x32xf32, #tpu.memory_space<vmem>>, vector<1x32xf32>
      %c0_9 = arith.constant 0 : index
      %c0_10 = arith.constant 0 : index
      %13 = vector.load %arg2[%c0_9, %c0_10] : memref<32x32xf32, #tpu.memory_space<vmem>>, vector<32x32xf32>
      %cst_11 = arith.constant dense<0.000000e+00> : vector<1x32xf32>
      %14 = tpu.matmul %12, %13, %cst_11 {dimension_numbers = #tpu.dot_dimension_numbers<[1], [0], [0], [1], [0, 0, 1, 1], [], []>} : vector<1x32xf32>, vector<32x32xf32>, vector<1x32xf32> -> vector<1x32xf32>
      %c0_12 = arith.constant 0 : index
      %c0_13 = arith.constant 0 : index
      %15 = vector.load %arg5[%c0_12, %c0_13] : memref<1x32xf32, #tpu.memory_space<vmem>>, vector<1x32xf32>
      tpu.vector_store %arg5[%c0_12, %c0_13], %14 {strides = array<i32>} : memref<1x32xf32, #tpu.memory_space<vmem>>, vector<1x32xf32>,
    } else {
    }
    %c0 = arith.constant 0 : index
    %c0_1 = arith.constant 0 : index
    %3 = vector.load %arg3[%c0, %c0_1] : memref<8x32xf32, #tpu.memory_space<vmem>>, vector<8x32xf32>
    %c0_2 = arith.constant 0 : index
    %c0_3 = arith.constant 0 : index
    %4 = vector.load %arg5[%c0_2, %c0_3] : memref<1x32xf32, #tpu.memory_space<vmem>>, vector<1x32xf32>
    %cst = arith.constant dense<0.000000e+00> : vector<8x1xf32>
    %5 = tpu.matmul %3, %4, %cst {dimension_numbers = #tpu.dot_dimension_numbers<[1], [1], [0], [0], [0, 0, 1, 0], [], []>} : vector<8x32xf32>, vector<1x32xf32>, vector<8x1xf32> -> vector<8x1xf32>
    %c8_i32 = arith.constant 8 : i32
    %6 = arith.muli %arg0, %c8_i32 : i32
    %7 = arith.index_cast %6 : i32 to index
    %c0_4 = arith.constant 0 : index
    %8 = vector.load %arg4[%7, %c0_4] : memref<8x1xf32, #tpu.memory_space<vmem>>, vector<8x1xf32>
    tpu.vector_store %arg4[%7, %c0_4], %5 {strides = array<i32>} : memref<8x1xf32, #tpu.memory_space<vmem>>, vector<8x1xf32>,
    %c0_i32_5 = arith.constant 0 : i32
    %9 = arith.cmpi eq, %arg0, %c0_i32_5 : i32
    %10 = arith.extui %9 : i1 to i32
    %c0_i32_6 = arith.constant 0 : i32
    %11 = arith.cmpi ne, %10, %c0_i32_6 : i32
    scf.if %11 {
      %c0_7 = arith.constant 0 : index
      %c0_8 = arith.constant 0 : index
      %12 = vector.load %arg4[%c0_7, %c0_8] : memref<8x1xf32, #tpu.memory_space<vmem>>, vector<8x1xf32>
      %13 = tpu.iota {dimensions = array<i32: 0>} : vector<8x1xi32>
      %c8_i32_9 = arith.constant 8 : i32
      %14 = vector.broadcast %c8_i32_9 : i32 to vector<8x1xi32>
      %15 = arith.cmpi slt, %13, %14 : vector<8x1xi32>
      %cst_10 = arith.constant 0xFF800000 : f32
      %16 = vector.broadcast %cst_10 : f32 to vector<8x1xf32>
      %17 = arith.select %15, %12, %16 : vector<8x1xi1>, vector<8x1xf32>
      %cst_11 = arith.constant dense<0xFF800000> : vector<1xf32>
      %18 = vector.multi_reduction <maximumf>, %17, %cst_11 [0] : vector<8x1xf32> to vector<1xf32>
      %19 = vector.shape_cast %18 : vector<1xf32> to vector<1x1xf32>
      %20 = vector.broadcast %19 : vector<1x1xf32> to vector<8x1xf32>
      %21 = arith.subf %17, %20 : vector<8x1xf32>
      %22 = math.exp %21 : vector<8x1xf32>
      %cst_12 = arith.constant dense<0.000000e+00> : vector<1xf32>
      %23 = vector.multi_reduction <add>, %22, %cst_12 [0] : vector<8x1xf32> to vector<1xf32>
      %24 = vector.shape_cast %23 : vector<1xf32> to vector<1x1xf32>
      %25 = vector.broadcast %24 : vector<1x1xf32> to vector<8x1xf32>
      %26 = arith.divf %22, %25 : vector<8x1xf32>
      %c0_13 = arith.constant 0 : index
      %c0_14 = arith.constant 0 : index
      %27 = vector.load %arg4[%c0_13, %c0_14] : memref<8x1xf32, #tpu.memory_space<vmem>>, vector<8x1xf32>
      tpu.vector_store %arg4[%c0_13, %c0_14], %26 {strides = array<i32>} : memref<8x1xf32, #tpu.memory_space<vmem>>, vector<8x1xf32>,
    } else {
    }
    return
  }
  func.func @transform_0(%arg0: i32) -> (i32, i32) {
    %c0_i32 = arith.constant 0 : i32
    %c0_i32_0 = arith.constant 0 : i32
    %c0_i32_1 = arith.constant 0 : i32
    return %c0_i32, %c0_i32_0 : i32, i32
  }
  func.func @transform_1(%arg0: i32) -> (i32, i32) {
    %c0_i32 = arith.constant 0 : i32
    %c0_i32_0 = arith.constant 0 : i32
    %c0_i32_1 = arith.constant 0 : i32
    return %c0_i32, %c0_i32_0 : i32, i32
  }
  func.func @transform_2(%arg0: i32) -> (i32, i32) {
    %c0_i32 = arith.constant 0 : i32
    %c0_i32_0 = arith.constant 0 : i32
    return %arg0, %c0_i32 : i32, i32
  }
  func.func @transform_3(%arg0: i32) -> (i32, i32) {
    %c0_i32 = arith.constant 0 : i32
    %c0_i32_0 = arith.constant 0 : i32
    %c0_i32_1 = arith.constant 0 : i32
    return %c0_i32, %c0_i32_0 : i32, i32
  }
}

</mosaic_0001>

<llo_original>
// kernel: tpu_custom_call.1
$region0: #{tpu_custom_call.1}
  #allocation0 [shape = 'u32[]', space=smem, size = 0x4, offset = 0x4, fixed_abs, tag = 'smem constant byte address 0x4 - core index']
  #allocation1 [shape = 'u32[144,128]{1,0:T(1,128)}', space=vmem, size = 0x12000, scoped, tag = 'internal scratch']
  #allocation2 [shape = 'f32[1,32]{1,0:T(1,128)}', space=vmem, size = 0x200, scoped, tag = 'scratch operand']
  %s0 = inlined_call_operand.hbm [shape: f32[1,32], index: 0, kind: input, shape index: {}]
  %s1 = inlined_call_operand.hbm [shape: f32[32,32], index: 1, kind: input, shape index: {}]
  %s2 = inlined_call_operand.hbm [shape: f32[8,32], index: 2, kind: input, shape index: {}]
  %s3 = inlined_call_operand.vmem [shape: f32[8,1], index: 3, kind: output, shape index: {}]
  %s4 = sld [smem:[#allocation0]]
  $region42: #{tpu_custom_call.1} parent=0
    _
  %s6 = ssub.s32 1, %s4
  %s7 = scalar_select 0, %s6, %s4
  $region1: #{tpu_custom_call.1} parent=0
    #allocation3 [shape = 'u8[512]{0}', space=vmem, size = 0x400, scoped, tag = 'input window, operand 0, single buffered']
    #allocation4 [shape = 's32[1]{0}', space=sflag, size = 0x4, scoped, tag = 'scoped memory for tpu_custom_call.1']
    #allocation5 [shape = 'u8[16384]{0}', space=vmem, size = 0x4000, scoped, tag = 'input window, operand 1, single buffered']
    #allocation6 [shape = 's32[1]{0}', space=sflag, size = 0x4, scoped, tag = 'scoped memory for tpu_custom_call.1']
    #allocation7 [shape = 'u8[4096]{0}', space=vmem, size = 0x1000, scoped, tag = 'input window, operand 2, single buffered']
    %8 = vsyncpa [#allocation4], 0
    %9 = vsyncpa [#allocation6], 0
    // Predicated region
    $region2: #{tpu_custom_call.1} parent=1 // pred_check
      _
    $region3: #{tpu_custom_call.1} parent=1 // pred_check_branch
      %11 = sbr.rel (0) target = $region5
    $region4: #{tpu_custom_call.1} parent=1 // pred_region
      %s13 = ssub.s32 16, 16
      %14 = vsyncadd [#allocation4], %s13
      %s16 = sshll.u32 [#allocation3], 4
      %s17 = int_to_ptr.vmem [resolvable:$true] %s16
      %19 = dma.hbm_to_vmem [thread:$0]  %s0, 16, %s17, [#allocation4]
    $region5: #{tpu_custom_call.1} parent=1 // pred_fallthru
      _
    // Predicated region
    $region6: #{tpu_custom_call.1} parent=1 // pred_check
      _
    $region7: #{tpu_custom_call.1} parent=1 // pred_check_branch
      %21 = sbr.rel (0) target = $region9
    $region8: #{tpu_custom_call.1} parent=1 // pred_region
      %s23 = ssub.s32 512, 512
      %24 = vsyncadd [#allocation6], %s23
      %s25 = sshll.u32 [#allocation5], 4
      %s26 = int_to_ptr.vmem [resolvable:$true] %s25
      %31 = dma.hbm_to_vmem [thread:$0]  %s1, 512, %s26, [#allocation6], 128, 128, 8
    $region9: #{tpu_custom_call.1} parent=1 // pred_fallthru
      _
    // Predicated region
    $region10: #{tpu_custom_call.1} parent=1 // pred_check
      _
    $region11: #{tpu_custom_call.1} parent=1 // pred_check_branch
      %33 = sbr.rel (0) target = $region13
    $region12: #{tpu_custom_call.1} parent=1 // pred_region
      %s35 = ssub.s32 128, 128
      %36 = vsyncadd [#allocation6], %s35
      %s38 = sshll.u32 [#allocation7], 4
      %s39 = int_to_ptr.vmem [resolvable:$true] %s38
      %41 = dma.hbm_to_vmem [thread:$0]  %s2, 128, %s39, [#allocation6]
    $region13: #{tpu_custom_call.1} parent=1 // pred_fallthru
      _
    // Predicated region
    $region14: #{tpu_custom_call.1} parent=1 // pred_check
      _
    $region15: #{tpu_custom_call.1} parent=1 // pred_check_branch
      %43 = sbr.rel (0) target = $region17
    $region16: #{tpu_custom_call.1} parent=1 // pred_region
      %44 = dma.done [#allocation4], 16
    $region17: #{tpu_custom_call.1} parent=1 // pred_fallthru
      _
    // Predicated region
    $region18: #{tpu_custom_call.1} parent=1 // pred_check
      _
    $region19: #{tpu_custom_call.1} parent=1 // pred_check_branch
      %46 = sbr.rel (0) target = $region21
    $region20: #{tpu_custom_call.1} parent=1 // pred_region
      %47 = dma.done [#allocation6], 512
    $region21: #{tpu_custom_call.1} parent=1 // pred_fallthru
      _
    // Predicated region
    $region22: #{tpu_custom_call.1} parent=1 // pred_check
      _
    $region23: #{tpu_custom_call.1} parent=1 // pred_check_branch
      %49 = sbr.rel (0) target = $region25
    $region24: #{tpu_custom_call.1} parent=1 // pred_region
      %50 = dma.done [#allocation6], 128
    $region25: #{tpu_custom_call.1} parent=1 // pred_fallthru
      _
    %p51 = scmp.eq.s32.totalorder 0, 0
    // Predicated region
    $region26: #{tpu_custom_call.1} parent=1 // pred_check
      %p52 = pneg %p51
    $region27: #{tpu_custom_call.1} parent=1 // pred_check_branch
      %54 = sbr.rel (%p52) target = $region29
    $region28: #{tpu_custom_call.1} parent=1 // pred_region
      %v55 = vld [vmem:[#allocation3] sm:$0x1]
      %v56 = vld [vmem:[#allocation5] sm:$0xff]
      %v57 = vld [vmem:[#allocation5 + $0x8] sm:$0xff]
      %v58 = vld [vmem:[#allocation5 + $0x10] sm:$0xff]
      %v59 = vld [vmem:[#allocation5 + $0x18] sm:$0xff]
      %vm60 = vcmask 261120
      %v62 = vsel %vm60, %v55, 0
      %64 = vmatprep.subr.mxu0 0.0
      %65 = vmatpush1.msra.mxu0 %v56
      %66 = vmatprep.subr.mxu0 0.0
      %67 = vmatpush1.msra.mxu0 %v57
      %68 = vmatprep.subr.mxu0 0.0
      %69 = vmatpush1.msra.mxu0 %v58
      %70 = vmatprep.subr.mxu0 0.0
      %71 = vmatpush1.msra.mxu0 %v59
      %72 = vmatprep.subr.mxu0 0.0
      %73 = vmatpush1.msra.mxu0 0.0
      %74 = vmatprep.subr.mxu0 0.0
      %75 = vmatpush1.msra.mxu0 0.0
      %76 = vmatprep.subr.mxu0 0.0
      %77 = vmatpush1.msra.mxu0 0.0
      %78 = vmatprep.subr.mxu0 0.0
      %79 = vmatpush1.msra.mxu0 0.0
      %80 = vmatprep.subr.mxu0 0.0
      %81 = vmatpush1.msra.mxu0 0.0
      %82 = vmatprep.subr.mxu0 0.0
      %83 = vmatpush1.msra.mxu0 0.0
      %84 = vmatprep.subr.mxu0 0.0
      %85 = vmatpush1.msra.mxu0 0.0
      %86 = vmatprep.subr.mxu0 0.0
      %87 = vmatpush1.msra.mxu0 0.0
      %88 = vmatprep.subr.mxu0 0.0
      %89 = vmatpush1.msra.mxu0 0.0
      %90 = vmatprep.subr.mxu0 0.0
      %91 = vmatpush1.msra.mxu0 0.0
      %92 = vmatprep.subr.mxu0 0.0
      %93 = vmatpush1.msra.mxu0 0.0
      %94 = vmatprep.subr.mxu0 0.0
      %95 = vmatpush1.msra.mxu0 0.0
      %96 = vmatprep.subr.mxu0 0.0
      %97 = vmatpush1.msra.mxu0 0.0
      %98 = vmatprep.subr.mxu0 0.0
      %99 = vmatpush1.msra.mxu0 0.0
      %100 = vmatprep.subr.mxu0 0.0
      %101 = vmatpush1.msra.mxu0 0.0
      %102 = vmatprep.subr.mxu0 0.0
      %103 = vmatpush1.msra.mxu0 0.0
      %104 = vmatprep.subr.mxu0 0.0
      %105 = vmatpush1.msra.mxu0 0.0
      %106 = vmatprep.subr.mxu0 0.0
      %107 = vmatpush1.msra.mxu0 0.0
      %108 = vmatprep.subr.mxu0 0.0
      %109 = vmatpush1.msra.mxu0 0.0
      %110 = vmatprep.subr.mxu0 0.0
      %111 = vmatpush1.msra.mxu0 0.0
      %112 = vmatprep.subr.mxu0 0.0
      %113 = vmatpush1.msra.mxu0 0.0
      %114 = vmatprep.subr.mxu0 0.0
      %115 = vmatpush1.msra.mxu0 0.0
      %116 = vmatprep.subr.mxu0 0.0
      %117 = vmatpush1.msra.mxu0 0.0
      %118 = vmatprep.subr.mxu0 0.0
      %119 = vmatpush1.msra.mxu0 0.0
      %120 = vmatprep.subr.mxu0 0.0
      %121 = vmatpush1.msra.mxu0 0.0
      %122 = vmatprep.subr.mxu0 0.0
      %123 = vmatpush1.msra.mxu0 0.0
      %124 = vmatprep.subr.mxu0 0.0
      %125 = vmatpush1.msra.mxu0 0.0
      %126 = vmatprep.subr.mxu0 0.0
      %127 = vmatpush1.msra.mxu0 0.0
      %128 = vmatprep.mubr.f32.mxu0 0.0
      %129 = vmatmul.mubr.f32.gmra.mrb[0].mxu0 %v62
      %v130 = vpop.f32.mrb[0].mxu0
      %v131 = vadd.f32 0.0, %v130
      %v132 = vpop.f32.mrb[0].mxu0
      %133 = vdwg.mxu0
      %vm134 = vcmask 253952
      %135 = vst.msk [vmem:[#allocation2] sm:$0x1] %vm134, %v131
    $region29: #{tpu_custom_call.1} parent=1 // pred_fallthru
      _
    %v136 = vld [vmem:[#allocation7] sm:$0xff]
    %v137 = vld [vmem:[#allocation2] sm:$0x1]
    %v139 = vlaneseq
    %v140 = vshrl.u32 %v139, 7
    %v141 = vsub.s32 0, %v140
    %v142 = vrot.slane %v137, %v141
    %v144 = vmul.f32 %v136, %v142
    %vm145 = vcmask 261120
    %v146 = vsel %vm145, %v144, 0.0
    %147 = vadd.xlane.f32.xlu0 %v146
    %v148 = vpop.xlane.xlu0 %147
    %s149 = smul.u32 0, 8
    %s150 = scalar_lea.vmem %s3, %s149
    %vm151 = vcmask 7168
    %152 = vst.msk [vmem:[%s150] sm:$0xff] %vm151, %v148
    // Predicated region
    $region30: #{tpu_custom_call.1} parent=1 // pred_check
      %p153 = pneg %p51
    $region31: #{tpu_custom_call.1} parent=1 // pred_check_branch
      %155 = sbr.rel (%p153) target = $region33
    $region32: #{tpu_custom_call.1} parent=1 // pred_region
      %v156 = vld [vmem:[%s3] sm:$0xff]
      %v157 = vlaneseq
      %v158 = vshrl.u32 %v157, 7
      %vm159 = vcmp.lt.s32.totalorder %v158, 8
      %v160 = vsel %vm159, %v156, -inf
      %v161 = vsel %vm151, %v160, -inf
      %v162 = vrot.slane %v161, 4
      %v163 = vmax.f32 %v161, %v162
      %v164 = vrot.slane %v163, 2
      %v165 = vmax.f32 %v163, %v164
      %v166 = vrot.slane %v165, 1
      %v167 = vmax.f32 %v165, %v166
      %v168 = vsub.f32 %v160, %v167
      %v169 = vmul.f32 %v168, 1.442695
      %v170 = vpow.pop %v169
      %v171 = vsel %vm151, %v170, 0.0
      %v172 = vrot.slane %v171, 4
      %v173 = vadd.f32 %v171, %v172
      %v174 = vrot.slane %v173, 2
      %v175 = vadd.f32 %v173, %v174
      %v176 = vrot.slane %v175, 1
      %v177 = vadd.f32 %v175, %v176
      %v178 = vrcp.pop %v177
      %v179 = vmul.f32 %v170, %v178
      %180 = vst.msk [vmem:[%s3] sm:$0xff] %vm151, %v179
    $region33: #{tpu_custom_call.1} parent=1 // pred_fallthru
      _
    // Predicated region
    $region34: #{tpu_custom_call.1} parent=1 // pred_check
      _
    $region35: #{tpu_custom_call.1} parent=1 // pred_check_branch
      %182 = sbr.rel (0) target = $region37
    $region36: #{tpu_custom_call.1} parent=1 // pred_region
      _
    $region37: #{tpu_custom_call.1} parent=1 // pred_fallthru
      _
    // Predicated region
    $region38: #{tpu_custom_call.1} parent=1 // pred_check
      _
    $region39: #{tpu_custom_call.1} parent=1 // pred_check_branch
      %184 = sbr.rel (0) target = $region41
    $region40: #{tpu_custom_call.1} parent=1 // pred_region
      _
    $region41: #{tpu_custom_call.1} parent=1 // pred_fallthru
      _
    %185 = vsyncpa [#allocation4], 1
    %186 = vsyncpa [#allocation6], 1

</llo_original>
